<compile_context>
chip_gen: v7x
topology: tpu7x:2x2x1
jax: 0.10.0
libtpu: 0.0.40
codegen_flags: <defaults>
</compile_context>

<pallas_src>
import functools
import math

import jax
import jax.numpy as jnp
from jax import lax
from jax.experimental import pallas as pl
from jax.experimental.pallas import tpu as pltpu


def _deconv_phase_kernel(x_ref, w_ref, b_ref, o_ref, *, phase_taps, w_pad, acc_w):
    """One (batch, H-tile) grid step: all sub-pixel phases of ConvT + bias + ReLU.

    x_ref : (Cin, BLK_IN)              flattened (rows * W_pad) padded input
    w_ref : (KH*KW, Cout, Cin)         per-tap weight matrices
    b_ref : (Cout, 1)                  bias
    o_ref : (n_phases, Cout, BLK_OUT)  flattened per-phase outputs
    """
    bias = b_ref[...]                                      # (Cout, 1)
    cout = o_ref.shape[1]
    for p, taps in enumerate(phase_taps):                  # static python loops
        acc = None
        for (tidx, oh, ow) in taps:
            start = oh * w_pad + ow                        # static offset
            window = x_ref[:, start:start + acc_w]         # (Cin, acc_w), lane-dense
            contrib = jnp.dot(w_ref[tidx], window,
                              preferred_element_type=jnp.float32)
            acc = contrib if acc is None else acc + contrib
        if acc is None:                                    # phase with no taps
            acc = jnp.zeros((cout, acc_w), jnp.float32)
        acc = jnp.maximum(acc + bias, 0.0)                 # fused bias + ReLU
        o_ref[p, :, :acc_w] = acc.astype(o_ref.dtype)      # dense store


def _taps_1d(K, s, p):
    """Per output phase r in [0, s): list of (k, d) with out[i*s + r] += x[i - d] * w[k]."""
    out = []
    for r in range(s):
        lst = []
        for k in range(K):
            if (k - r - p) % s == 0:
                lst.append((k, (k - r - p) // s))
        out.append(lst)
    return out


def deconv_relu(x_nchw, weight, bias, stride, padding, *, compute_dtype=None):
    """relu(ConvTranspose2d(stride, padding)(x)).

    x_nchw : (N, Cin, H, W)       float32 (PyTorch NCHW layout)
    weight : (Cin, Cout, KH, KW)  PyTorch ConvTranspose2d weight layout
    bias   : (Cout,)
    Returns (N, Cout, H_out, W_out).
    """
    N, Cin, H, W = x_nchw.shape
    Cout = weight.shape[1]
    KH, KW = weight.shape[2], weight.shape[3]
    sh, sw = (stride, stride) if isinstance(stride, int) else tuple(stride)
    ph, pw = (padding, padding) if isinstance(padding, int) else tuple(padding)

    H_out = (H - 1) * sh - 2 * ph + KH
    W_out = (W - 1) * sw - 2 * pw + KW
    assert H_out > 0 and W_out > 0

    H_SUB = pl.cdiv(H_out, sh)          # rows per H-phase
    W_SUB = pl.cdiv(W_out, sw)          # cols per W-phase

    # --- sub-pixel tap structure (static python) ---
    h_taps = _taps_1d(KH, sh, ph)
    w_taps = _taps_1d(KW, sw, pw)
    all_dh = [d for lst in h_taps for (_, d) in lst]
    all_dw = [d for lst in w_taps for (_, d) in lst]
    lo_h, lo_w = max(all_dh), max(all_dw)
    oh_max = lo_h - min(all_dh)         # row-offset span used inside a block
    ow_max = lo_w - min(all_dw)         # col-offset span used inside a block

    # --- H tiling (only when every tap reads the same relative row -> no halo) ---
    tile_h = H_SUB
    if oh_max == 0:
        for cand in (8, 16, 32):
            if H_SUB > cand and H_SUB % cand == 0:
                tile_h = cand
                break
    n_h_tiles = H_SUB // tile_h

    # --- padded, flattened input (small pad; no zero-dilation) ---
    W_pad = W_SUB + ow_max
    if n_h_tiles > 1:
        # tiled minor (lane) block dim must be a multiple of 128
        g = 128 // math.gcd(tile_h, 128)
        W_pad = ((W_pad + g - 1) // g) * g
    H_pad = H_SUB + oh_max
    hi_h = H_pad - H - lo_h
    hi_w = W_pad - W - lo_w
    xp = lax.pad(x_nchw, jnp.array(0, x_nchw.dtype),
                 ((0, 0, 0), (0, 0, 0), (lo_h, hi_h, 0), (lo_w, hi_w, 0)))
    x_flat = xp.reshape(N, Cin, H_pad * W_pad)             # free reshape

    # --- per-tap weights (phase-major) + static tap table ---
    n_phases = sh * sw
    phase_taps, w_list, tidx = [], [], 0
    for rh in range(sh):
        for rw in range(sw):
            lst = []
            for (kh, dh) in h_taps[rh]:
                for (kw, dw) in w_taps[rw]:
                    w_list.append(jnp.transpose(weight[:, :, kh, kw]))  # (Cout, Cin)
                    lst.append((tidx, lo_h - dh, lo_w - dw))
                    tidx += 1
            phase_taps.append(tuple(lst))
    w_all = jnp.stack(w_list, axis=0)                      # (KH*KW, Cout, Cin)
    b2d = bias.reshape(Cout, 1).astype(jnp.float32)

    if compute_dtype is not None:                          # e.g. jnp.bfloat16 on v6e/v7x
        x_flat = x_flat.astype(compute_dtype)
        w_all = w_all.astype(compute_dtype)

    BLK_OUT = tile_h * W_pad
    BLK_IN = H_pad * W_pad if n_h_tiles == 1 else BLK_OUT
    ACC_W = BLK_OUT - ow_max

    kernel = functools.partial(_deconv_phase_kernel,
                               phase_taps=tuple(phase_taps),
                               w_pad=W_pad, acc_w=ACC_W)

    out_flat = pl.pallas_call(
        kernel,
        out_shape=jax.ShapeDtypeStruct((N, n_phases, Cout, H_SUB * W_pad),
                                       x_nchw.dtype),
        grid=(N, n_h_tiles),
        in_specs=[
            pl.BlockSpec((None, Cin, BLK_IN), lambda n, t: (n, 0, t)),
            pl.BlockSpec((KH * KW, Cout, Cin), lambda n, t: (0, 0, 0)),
            pl.BlockSpec((Cout, 1), lambda n, t: (0, 0)),
        ],
        out_specs=pl.BlockSpec((None, n_phases, Cout, BLK_OUT),
                               lambda n, t: (n, 0, 0, t)),
        compiler_params=pltpu.CompilerParams(
            dimension_semantics=("parallel", "parallel"),
            vmem_limit_bytes=48 * 1024 * 1024),
    )(x_flat, w_all, b2d)

    # --- assemble: drop per-row padding, interleave the sub-pixel phases (1 fused pass) ---
    out = out_flat.reshape(N, sh, sw, Cout, H_SUB, W_pad)[..., :W_SUB]
    out = jnp.transpose(out, (0, 3, 4, 1, 5, 2))           # (N, Cout, H_SUB, sh, W_SUB, sw)
    out = out.reshape(N, Cout, H_SUB * sh, W_SUB * sw)
    return out[:, :, :H_out, :W_out]


def _reference(x_nchw, weight, bias, stride, padding):
    """Pure-JAX reference using XLA's dilated conv (independent code path)."""
    KH, KW = weight.shape[2], weight.shape[3]
    sh, sw = stride
    ph, pw = padding
    x_nhwc = jnp.transpose(x_nchw, (0, 2, 3, 1))
    w_hwio = jnp.transpose(jnp.flip(weight, axis=(2, 3)), (2, 3, 0, 1))
    y = lax.conv_general_dilated(
        x_nhwc, w_hwio,
        window_strides=(1, 1),
        padding=[(KH - 1 - ph, KH - 1 - ph), (KW - 1 - pw, KW - 1 - pw)],
        lhs_dilation=(sh, sw),
        dimension_numbers=("NHWC", "HWIO", "NHWC"))
    y = jnp.maximum(y + bias[None, None, None, :], 0.0)
    return jnp.transpose(y, (0, 3, 1, 2))


if __name__ == "__main__":
    # SqueezeSeg-style deconv: upsample width by 2.
    N, Cin, Cout = 2, 4, 8
    H, W = 4, 8
    kernel_size = (1, 4)
    stride = (1, 2)
    padding = (0, 1)

    key = jax.random.PRNGKey(0)
    kx, kw, kb = jax.random.split(key, 3)
    x = jax.random.normal(kx, (N, Cin, H, W), dtype=jnp.float32)
    # ConvTranspose2d weight layout: (Cin, Cout, KH, KW)
    weight = 0.1 * jax.random.normal(
        kw, (Cin, Cout, kernel_size[0], kernel_size[1]), dtype=jnp.float32)
    bias = 0.1 * jax.random.normal(kb, (Cout,), dtype=jnp.float32)

    out = deconv_relu(x, weight, bias, stride, padding)
    out = jax.block_until_ready(out)

    ref = _reference(x, weight, bias, stride, padding)
    assert out.shape == ref.shape, (out.shape, ref.shape)
    assert jnp.allclose(out, ref, atol=1e-5, rtol=1e-5), "mismatch vs reference"

    print("KERNEL_OK")
</pallas_src>

<mosaic_0001>
module attributes {stable_mosaic.version = 11 : i64} {
  func.func @_deconv_phase_kernel(%arg0: i32, %arg1: i32, %arg2: memref<1x4x40xf32, #tpu.memory_space<vmem>>, %arg3: memref<4x8x4xf32, #tpu.memory_space<vmem>>, %arg4: memref<8x1xf32, #tpu.memory_space<vmem>>, %arg5: memref<1x2x8x40xf32, #tpu.memory_space<vmem>>) attributes {dimension_semantics = [#tpu.dimension_semantics<parallel>, #tpu.dimension_semantics<parallel>], iteration_bounds = array<i64: 2, 1>, scalar_prefetch = 0 : i64, scratch_operands = 0 : i64, tpu.core_type = #tpu.core_type<tc>, window_params = [{transform_indices = @transform_0, window_bounds = array<i64: 1, 4, 40>}, {pipeline_mode = #tpu.pipeline_mode<synchronous>, transform_indices = @transform_1, window_bounds = array<i64: 4, 8, 4>}, {pipeline_mode = #tpu.pipeline_mode<synchronous>, transform_indices = @transform_2, window_bounds = array<i64: 8, 1>}, {transform_indices = @transform_3, window_bounds = array<i64: 1, 2, 8, 40>}]} {
    %c0 = arith.constant 0 : index
    %c0_0 = arith.constant 0 : index
    %0 = vector.load %arg4[%c0, %c0_0] : memref<8x1xf32, #tpu.memory_space<vmem>>, vector<8x1xf32>
    %c0_1 = arith.constant 0 : index
    %c0_2 = arith.constant 0 : index
    %c1 = arith.constant 1 : index
    %1 = vector.load %arg2[%c0_1, %c0_2, %c1] : memref<1x4x40xf32, #tpu.memory_space<vmem>>, vector<1x4x38xf32>
    %2 = vector.shape_cast %1 : vector<1x4x38xf32> to vector<4x38xf32>
    %c0_3 = arith.constant 0 : index
    %c0_4 = arith.constant 0 : index
    %c0_5 = arith.constant 0 : index
    %3 = vector.load %arg3[%c0_3, %c0_4, %c0_5] : memref<4x8x4xf32, #tpu.memory_space<vmem>>, vector<1x8x4xf32>
    %4 = vector.shape_cast %3 : vector<1x8x4xf32> to vector<8x4xf32>
    %cst = arith.constant dense<0.000000e+00> : vector<8x38xf32>
    %5 = tpu.matmul %4, %2, %cst {dimension_numbers = #tpu.dot_dimension_numbers<[1], [0], [0], [1], [0, 0, 1, 1], [], []>} : vector<8x4xf32>, vector<4x38xf32>, vector<8x38xf32> -> vector<8x38xf32>
    %c0_6 = arith.constant 0 : index
    %c0_7 = arith.constant 0 : index
    %c0_8 = arith.constant 0 : index
    %6 = vector.load %arg2[%c0_6, %c0_7, %c0_8] : memref<1x4x40xf32, #tpu.memory_space<vmem>>, vector<1x4x38xf32>
    %7 = vector.shape_cast %6 : vector<1x4x38xf32> to vector<4x38xf32>
    %c1_9 = arith.constant 1 : index
    %c0_10 = arith.constant 0 : index
    %c0_11 = arith.constant 0 : index
    %8 = vector.load %arg3[%c1_9, %c0_10, %c0_11] : memref<4x8x4xf32, #tpu.memory_space<vmem>>, vector<1x8x4xf32>
    %9 = vector.shape_cast %8 : vector<1x8x4xf32> to vector<8x4xf32>
    %cst_12 = arith.constant dense<0.000000e+00> : vector<8x38xf32>
    %10 = tpu.matmul %9, %7, %cst_12 {dimension_numbers = #tpu.dot_dimension_numbers<[1], [0], [0], [1], [0, 0, 1, 1], [], []>} : vector<8x4xf32>, vector<4x38xf32>, vector<8x38xf32> -> vector<8x38xf32>
    %11 = arith.addf %5, %10 : vector<8x38xf32>
    %12 = vector.broadcast %0 : vector<8x1xf32> to vector<8x38xf32>
    %13 = arith.addf %11, %12 : vector<8x38xf32>
    %cst_13 = arith.constant 0.000000e+00 : f32
    %14 = vector.broadcast %cst_13 : f32 to vector<8x38xf32>
    %15 = arith.maximumf %13, %14 : vector<8x38xf32>
    %c0_14 = arith.constant 0 : index
    %c0_15 = arith.constant 0 : index
    %c0_16 = arith.constant 0 : index
    %c0_17 = arith.constant 0 : index
    %16 = vector.load %arg5[%c0_14, %c0_15, %c0_16, %c0_17] : memref<1x2x8x40xf32, #tpu.memory_space<vmem>>, vector<1x1x8x38xf32>
    %17 = vector.shape_cast %16 : vector<1x1x8x38xf32> to vector<8x38xf32>
    %18 = vector.shape_cast %15 : vector<8x38xf32> to vector<1x1x8x38xf32>
    tpu.vector_store %arg5[%c0_14, %c0_15, %c0_16, %c0_17], %18 {strides = array<i32>} : memref<1x2x8x40xf32, #tpu.memory_space<vmem>>, vector<1x1x8x38xf32>,
    %c0_18 = arith.constant 0 : index
    %c0_19 = arith.constant 0 : index
    %c2 = arith.constant 2 : index
    %19 = vector.load %arg2[%c0_18, %c0_19, %c2] : memref<1x4x40xf32, #tpu.memory_space<vmem>>, vector<1x4x38xf32>
    %20 = vector.shape_cast %19 : vector<1x4x38xf32> to vector<4x38xf32>
    %c2_20 = arith.constant 2 : index
    %c0_21 = arith.constant 0 : index
    %c0_22 = arith.constant 0 : index
    %21 = vector.load %arg3[%c2_20, %c0_21, %c0_22] : memref<4x8x4xf32, #tpu.memory_space<vmem>>, vector<1x8x4xf32>
    %22 = vector.shape_cast %21 : vector<1x8x4xf32> to vector<8x4xf32>
    %cst_23 = arith.constant dense<0.000000e+00> : vector<8x38xf32>
    %23 = tpu.matmul %22, %20, %cst_23 {dimension_numbers = #tpu.dot_dimension_numbers<[1], [0], [0], [1], [0, 0, 1, 1], [], []>} : vector<8x4xf32>, vector<4x38xf32>, vector<8x38xf32> -> vector<8x38xf32>
    %c0_24 = arith.constant 0 : index
    %c0_25 = arith.constant 0 : index
    %c1_26 = arith.constant 1 : index
    %24 = vector.load %arg2[%c0_24, %c0_25, %c1_26] : memref<1x4x40xf32, #tpu.memory_space<vmem>>, vector<1x4x38xf32>
    %25 = vector.shape_cast %24 : vector<1x4x38xf32> to vector<4x38xf32>
    %c3 = arith.constant 3 : index
    %c0_27 = arith.constant 0 : index
    %c0_28 = arith.constant 0 : index
    %26 = vector.load %arg3[%c3, %c0_27, %c0_28] : memref<4x8x4xf32, #tpu.memory_space<vmem>>, vector<1x8x4xf32>
    %27 = vector.shape_cast %26 : vector<1x8x4xf32> to vector<8x4xf32>
    %cst_29 = arith.constant dense<0.000000e+00> : vector<8x38xf32>
    %28 = tpu.matmul %27, %25, %cst_29 {dimension_numbers = #tpu.dot_dimension_numbers<[1], [0], [0], [1], [0, 0, 1, 1], [], []>} : vector<8x4xf32>, vector<4x38xf32>, vector<8x38xf32> -> vector<8x38xf32>
    %29 = arith.addf %23, %28 : vector<8x38xf32>
    %30 = vector.broadcast %0 : vector<8x1xf32> to vector<8x38xf32>
    %31 = arith.addf %29, %30 : vector<8x38xf32>
    %cst_30 = arith.constant 0.000000e+00 : f32
    %32 = vector.broadcast %cst_30 : f32 to vector<8x38xf32>
    %33 = arith.maximumf %31, %32 : vector<8x38xf32>
    %c0_31 = arith.constant 0 : index
    %c1_32 = arith.constant 1 : index
    %c0_33 = arith.constant 0 : index
    %c0_34 = arith.constant 0 : index
    %34 = vector.load %arg5[%c0_31, %c1_32, %c0_33, %c0_34] : memref<1x2x8x40xf32, #tpu.memory_space<vmem>>, vector<1x1x8x38xf32>
    %35 = vector.shape_cast %34 : vector<1x1x8x38xf32> to vector<8x38xf32>
    %36 = vector.shape_cast %33 : vector<8x38xf32> to vector<1x1x8x38xf32>
    tpu.vector_store %arg5[%c0_31, %c1_32, %c0_33, %c0_34], %36 {strides = array<i32>} : memref<1x2x8x40xf32, #tpu.memory_space<vmem>>, vector<1x1x8x38xf32>,
    return
  }
  func.func @transform_0(%arg0: i32, %arg1: i32) -> (i32, i32, i32) {
    %c0_i32 = arith.constant 0 : i32
    %c0_i32_0 = arith.constant 0 : i32
    return %arg0, %c0_i32, %arg1 : i32, i32, i32
  }
  func.func @transform_1(%arg0: i32, %arg1: i32) -> (i32, i32, i32) {
    %c0_i32 = arith.constant 0 : i32
    %c0_i32_0 = arith.constant 0 : i32
    %c0_i32_1 = arith.constant 0 : i32
    %c0_i32_2 = arith.constant 0 : i32
    return %c0_i32, %c0_i32_0, %c0_i32_1 : i32, i32, i32
  }
  func.func @transform_2(%arg0: i32, %arg1: i32) -> (i32, i32) {
    %c0_i32 = arith.constant 0 : i32
    %c0_i32_0 = arith.constant 0 : i32
    %c0_i32_1 = arith.constant 0 : i32
    return %c0_i32, %c0_i32_0 : i32, i32
  }
  func.func @transform_3(%arg0: i32, %arg1: i32) -> (i32, i32, i32, i32) {
    %c0_i32 = arith.constant 0 : i32
    %c0_i32_0 = arith.constant 0 : i32
    %c0_i32_1 = arith.constant 0 : i32
    return %arg0, %c0_i32, %c0_i32_0, %arg1 : i32, i32, i32, i32
  }
}

</mosaic_0001>

<llo_original>
// kernel: tpu_custom_call.1
$region0: #{tpu_custom_call.1}
  #allocation0 [shape = 'u32[]', space=smem, size = 0x4, offset = 0x4, fixed_abs, tag = 'smem constant byte address 0x4 - core index']
  #allocation1 [shape = 'u32[144,128]{1,0:T(1,128)}', space=vmem, size = 0x12000, scoped, tag = 'internal scratch']
  %s0 = inlined_call_operand.vmem [shape: f32[2,4,40], index: 0, kind: input, shape index: {}]
  %s1 = inlined_call_operand.vmem [shape: f32[4,8,4], index: 1, kind: input, shape index: {}]
  %s2 = inlined_call_operand.vmem [shape: f32[8,1], index: 2, kind: input, shape index: {}]
  %s3 = inlined_call_operand.hbm [shape: f32[2,2,8,40], index: 3, kind: output, shape index: {}]
  %s4 = sld [smem:[#allocation0]]
  $region45: #{tpu_custom_call.1} parent=0
    _
  %s6 = ssub.s32 1, %s4
  %s7 = scalar_select 0, %s6, %s4
  $region1: #{tpu_custom_call.1} parent=0
    #allocation2 [shape = 'u8[16384]{0}', space=vmem, size = 0x4000, scoped, tag = 'output window, operand 0']
    #allocation3 [shape = 's32[2]{0}', space=sflag, size = 0x8, scoped, tag = 'scoped memory for tpu_custom_call.1']
    %8 = vsyncpa [#allocation3], 0
    %s9 = scalar_lea.sflag [#allocation3], 1
    %10 = vsyncpa %s9, 0
    loop: start=0, step=1, limit=4
    $region2: #{tpu_custom_call.1} parent=1 // loop_pre_header
      _
    $region3: #{tpu_custom_call.1} parent=1 // loop_header
      %s12 = sphi 0, %s16
      %p13 = scmp.ge.s32.totalorder %s12, 4
      %s19 = sphi 0, %s31
      %s20 = sphi 0, %s27
      %s21 = sphi 0, %s19
      %s22 = sphi 0, %s20
      %s23 = sphi 0, %s21
      %s24 = sphi 0, %s22
      %s36 = sphi 0, %s38
      %s39 = sphi 0, %s36
      %s40 = sphi 0, %s39
      %s56 = sphi 0, %s40
      %s60 = sphi 0, %s60
      %s62 = sphi 0, %s60
      %s63 = sphi 0, %s62
      %s77 = sphi 0, %s63
      %s81 = sphi 0, %s81
      %s83 = sphi 0, %s81
      %s84 = sphi 0, %s83
      %s98 = sphi 0, %s84
      %s106 = sphi 0, %s108
      %s109 = sphi 0, %s106
      %s110 = sphi 0, %s109
      %s126 = sphi 0, %s110
    $region4: #{tpu_custom_call.1} parent=1 // loop_header_branch
      %15 = sbr.rel (%p13) target = $region8
    $region5: #{tpu_custom_call.1} parent=1 // loop_body
      %s17 = ssub.s32 %s12, 1
      %s18 = ssub.s32 %s12, 2
      %s25 = sadd.s32 1, %s20
      %p26 = scmp.ge.s32.totalorder %s25, 1
      %s27 = scalar_select %p26, 0, %s25
      %s28 = sadd.s32 1, %s19
      %s29 = scalar_select %p26, %s28, %s19
      %p30 = scmp.ge.s32.totalorder %s29, 2
      %s31 = scalar_select %p30, 0, %s29
      %s32 = ssub.s32 %s19, %s31
      %s33 = ssub.s32 %s20, %s27
      %s34 = sor.u32 %s32, %s33
      %p35 = scmp.eq.s32.totalorder %s34, 0
      %s37 = sadd.s32 %s36, 1
      %s38 = scalar_select %p35, %s36, %s37
      %p41 = pneg %p35
      %p42 = scmp.eq.s32.totalorder %s12, 1
      %p43 = por %p41, %p42
      %p44 = scmp.ne.s32.totalorder %s36, %s39
      %p45 = scmp.eq.s32.totalorder %s12, 0
      %p46 = por %p44, %p45
      %p47 = scmp.ne.s32.totalorder %s36, %s39
      %p48 = scmp.eq.s32.totalorder %s17, 1
      %p49 = por %p47, %p48
      %p50 = scmp.ne.s32.totalorder %s39, %s40
      %p51 = scmp.eq.s32.totalorder %s17, 0
      %p52 = por %p50, %p51
      %p53 = scmp.ne.s32.totalorder %s39, %s40
      %p54 = scmp.eq.s32.totalorder %s18, 1
      %p55 = por %p53, %p54
      %p57 = scmp.ne.s32.totalorder %s40, %s56
      %p58 = scmp.eq.s32.totalorder %s18, 0
      %p59 = por %p57, %p58
      %s61 = sadd.s32 %s60, 1
      %p64 = scmp.eq.s32.totalorder %s12, 1
      %p65 = scmp.ne.s32.totalorder %s60, %s62
      %p66 = scmp.eq.s32.totalorder %s12, 0
      %p67 = por %p65, %p66
      %p68 = scmp.ne.s32.totalorder %s60, %s62
      %p69 = scmp.eq.s32.totalorder %s17, 1
      %p70 = por %p68, %p69
      %p71 = scmp.ne.s32.totalorder %s62, %s63
      %p72 = scmp.eq.s32.totalorder %s17, 0
      %p73 = por %p71, %p72
      %p74 = scmp.ne.s32.totalorder %s62, %s63
      %p75 = scmp.eq.s32.totalorder %s18, 1
      %p76 = por %p74, %p75
      %p78 = scmp.ne.s32.totalorder %s63, %s77
      %p79 = scmp.eq.s32.totalorder %s18, 0
      %p80 = por %p78, %p79
      %s82 = sadd.s32 %s81, 1
      %p85 = scmp.eq.s32.totalorder %s12, 1
      %p86 = scmp.ne.s32.totalorder %s81, %s83
      %p87 = scmp.eq.s32.totalorder %s12, 0
      %p88 = por %p86, %p87
      %p89 = scmp.ne.s32.totalorder %s81, %s83
      %p90 = scmp.eq.s32.totalorder %s17, 1
      %p91 = por %p89, %p90
      %p92 = scmp.ne.s32.totalorder %s83, %s84
      %p93 = scmp.eq.s32.totalorder %s17, 0
      %p94 = por %p92, %p93
      %p95 = scmp.ne.s32.totalorder %s83, %s84
      %p96 = scmp.eq.s32.totalorder %s18, 1
      %p97 = por %p95, %p96
      %p99 = scmp.ne.s32.totalorder %s84, %s98
      %p100 = scmp.eq.s32.totalorder %s18, 0
      %p101 = por %p99, %p100
      %s102 = ssub.s32 %s19, %s31
      %s103 = ssub.s32 %s20, %s27
      %s104 = sor.u32 %s102, %s103
      %p105 = scmp.eq.s32.totalorder %s104, 0
      %s107 = sadd.s32 %s106, 1
      %s108 = scalar_select %p105, %s106, %s107
      %p111 = pneg %p105
      %p112 = scmp.eq.s32.totalorder %s12, 1
      %p113 = por %p111, %p112
      %p114 = scmp.ne.s32.totalorder %s106, %s109
      %p115 = scmp.eq.s32.totalorder %s12, 0
      %p116 = por %p114, %p115
      %p117 = scmp.ne.s32.totalorder %s106, %s109
      %p118 = scmp.eq.s32.totalorder %s17, 1
      %p119 = por %p117, %p118
      %p120 = scmp.ne.s32.totalorder %s109, %s110
      %p121 = scmp.eq.s32.totalorder %s17, 0
      %p122 = por %p120, %p121
      %p123 = scmp.ne.s32.totalorder %s109, %s110
      %p124 = scmp.eq.s32.totalorder %s18, 1
      %p125 = por %p123, %p124
      %p127 = scmp.ne.s32.totalorder %s110, %s126
      %p128 = scmp.eq.s32.totalorder %s18, 0
      %p129 = por %p127, %p128
      %p130 = scmp.le.s32.totalorder 1, %s12
      %p131 = scmp.lt.s32.totalorder %s12, 3
      %p132 = pnand %p130, %p131
      %p133 = pneg %p132
      // Predicated region
      $region9: #{tpu_custom_call.1} parent=5 // pred_check
        _
      $region10: #{tpu_custom_call.1} parent=5 // pred_check_branch
        %135 = sbr.rel (%p132) target = $region12
      $region11: #{tpu_custom_call.1} parent=5 // pred_region
        %s136 = ssub.s32 %s12, 1
        // Predicated region
        $region13: #{tpu_custom_call.1} parent=11 // pred_check
          %p137 = pneg %p73
        $region14: #{tpu_custom_call.1} parent=11 // pred_check_branch
          %139 = sbr.rel (%p137) target = $region16
        $region15: #{tpu_custom_call.1} parent=11 // pred_region
          _
        $region16: #{tpu_custom_call.1} parent=11 // pred_fallthru
          _
        // Predicated region
        $region17: #{tpu_custom_call.1} parent=11 // pred_check
          %p140 = pneg %p94
        $region18: #{tpu_custom_call.1} parent=11 // pred_check_branch
          %142 = sbr.rel (%p140) target = $region20
        $region19: #{tpu_custom_call.1} parent=11 // pred_region
          _
        $region20: #{tpu_custom_call.1} parent=11 // pred_fallthru
          _
      $region12: #{tpu_custom_call.1} parent=5 // pred_fallthru
        _
      %p143 = scmp.lt.s32.totalorder %s12, 2
      // Predicated region
      $region21: #{tpu_custom_call.1} parent=5 // pred_check
        %p144 = pneg %p143
      $region22: #{tpu_custom_call.1} parent=5 // pred_check_branch
        %146 = sbr.rel (%p144) target = $region24
      $region23: #{tpu_custom_call.1} parent=5 // pred_region
        // Predicated region
        $region25: #{tpu_custom_call.1} parent=23 // pred_check
          %p147 = pneg %p46
        $region26: #{tpu_custom_call.1} parent=23 // pred_check_branch
          %149 = sbr.rel (%p147) target = $region28
        $region27: #{tpu_custom_call.1} parent=23 // pred_region
          %p150 = scmp.lt.s32.totalorder %s19, 1
          %s151 = scalar_select %p150, %s19, 1
          %p152 = scmp.lt.s32.totalorder %s20, 0
          %s153 = scalar_select %p152, %s20, 0
          %s154 = sadd.s32 %s153, %s151
          %s155 = smul.addr %s154, 4
          %s156 = scalar_lea.vmem %s0, %s155
        $region28: #{tpu_custom_call.1} parent=23 // pred_fallthru
          _
      $region24: #{tpu_custom_call.1} parent=5 // pred_fallthru
        _
      %p157 = scmp.le.s32.totalorder 1, %s12
      %p158 = scmp.lt.s32.totalorder %s12, 3
      %p159 = pnand %p157, %p158
      %p160 = pneg %p159
      // Predicated region
      $region29: #{tpu_custom_call.1} parent=5 // pred_check
        _
      $region30: #{tpu_custom_call.1} parent=5 // pred_check_branch
        %162 = sbr.rel (%p159) target = $region32
      $region31: #{tpu_custom_call.1} parent=5 // pred_region
        %s163 = ssub.s32 %s12, 1
        %p164 = scmp.lt.s32.totalorder %s21, 1
        %s165 = scalar_select %p164, %s21, 1
        %p166 = scmp.lt.s32.totalorder %s22, 0
        %s167 = scalar_select %p166, %s22, 0
        %s168 = sadd.s32 %s167, %s165
        %s169 = smul.addr %s168, 4
        %s170 = scalar_lea.vmem %s0, %s169
        %p171 = pneg %p52
        %p172 = pneg %p49
        %p173 = pneg %p73
        %p174 = pneg %p70
        %p175 = pneg %p94
        %p176 = pneg %p91
        %p177 = pneg %p122
        %p178 = pneg %p119
        %s179 = sand.u32 %s109, 1
        %s180 = scalar_lea.sflag [#allocation3], %s179
        %s181 = sand.u32 %s109, 1
        %s182 = smul.addr %s181, 16
        %s183 = scalar_lea.vmem [#allocation2], %s182
        %p184 = scmp.lt.s32.totalorder %s21, 1
        %s185 = scalar_select %p184, %s21, 1
        %p186 = scmp.lt.s32.totalorder %s22, 0
        %s187 = scalar_select %p186, %s22, 0
        %s188 = sadd.s32 %s187, %s185
        %s189 = smul.addr %s188, 4
        %s190 = scalar_lea.vmem %s0, %s189
        %v191 = vld [vmem:[%s2] sm:$0xff]
        %v192 = vld [vmem:[%s190] sm:$0xf]
        %v193 = vld [vmem:[%s1] sm:$0xff]
        %s194 = scalar_lea.vmem %s1, 8
        %v195 = vld [vmem:[%s194] sm:$0xff]
        %vm196 = vcmask 31744
        %v198 = vsel %vm196, %v195, 0
        %vm200 = vcmask 1043456
        %v202 = vsel %vm200, %v192, 0
        %204 = vmatprep.subr.mxu0 0.0
        %205 = vmatpush1.msra.mxu0 %v202
        %206 = vmatprep.subr.mxu0 0.0
        %207 = vmatpush1.msra.mxu0 0.0
        %208 = vmatprep.subr.mxu0 0.0
        %209 = vmatpush1.msra.mxu0 0.0
        %210 = vmatprep.subr.mxu0 0.0
        %211 = vmatpush1.msra.mxu0 0.0
        %212 = vmatprep.subr.mxu0 0.0
        %213 = vmatpush1.msra.mxu0 0.0
        %214 = vmatprep.subr.mxu0 0.0
        %215 = vmatpush1.msra.mxu0 0.0
        %216 = vmatprep.subr.mxu0 0.0
        %217 = vmatpush1.msra.mxu0 0.0
        %218 = vmatprep.subr.mxu0 0.0
        %219 = vmatpush1.msra.mxu0 0.0
        %220 = vmatprep.subr.mxu0 0.0
        %221 = vmatpush1.msra.mxu0 0.0
        %222 = vmatprep.subr.mxu0 0.0
        %223 = vmatpush1.msra.mxu0 0.0
        %224 = vmatprep.subr.mxu0 0.0
        %225 = vmatpush1.msra.mxu0 0.0
        %226 = vmatprep.subr.mxu0 0.0
        %227 = vmatpush1.msra.mxu0 0.0
        %228 = vmatprep.subr.mxu0 0.0
        %229 = vmatpush1.msra.mxu0 0.0
        %230 = vmatprep.subr.mxu0 0.0
        %231 = vmatpush1.msra.mxu0 0.0
        %232 = vmatprep.subr.mxu0 0.0
        %233 = vmatpush1.msra.mxu0 0.0
        %234 = vmatprep.subr.mxu0 0.0
        %235 = vmatpush1.msra.mxu0 0.0
        %236 = vmatprep.subr.mxu0 0.0
        %237 = vmatpush1.msra.mxu0 0.0
        %238 = vmatprep.subr.mxu0 0.0
        %239 = vmatpush1.msra.mxu0 0.0
        %240 = vmatprep.subr.mxu0 0.0
        %241 = vmatpush1.msra.mxu0 0.0
        %242 = vmatprep.subr.mxu0 0.0
        %243 = vmatpush1.msra.mxu0 0.0
        %244 = vmatprep.subr.mxu0 0.0
        %245 = vmatpush1.msra.mxu0 0.0
        %246 = vmatprep.subr.mxu0 0.0
        %247 = vmatpush1.msra.mxu0 0.0
        %248 = vmatprep.subr.mxu0 0.0
        %249 = vmatpush1.msra.mxu0 0.0
        %250 = vmatprep.subr.mxu0 0.0
        %251 = vmatpush1.msra.mxu0 0.0
        %252 = vmatprep.subr.mxu0 0.0
        %253 = vmatpush1.msra.mxu0 0.0
        %254 = vmatprep.subr.mxu0 0.0
        %255 = vmatpush1.msra.mxu0 0.0
        %256 = vmatprep.subr.mxu0 0.0
        %257 = vmatpush1.msra.mxu0 0.0
        %258 = vmatprep.subr.mxu0 0.0
        %259 = vmatpush1.msra.mxu0 0.0
        %260 = vmatprep.subr.mxu0 0.0
        %261 = vmatpush1.msra.mxu0 0.0
        %262 = vmatprep.subr.mxu0 0.0
        %263 = vmatpush1.msra.mxu0 0.0
        %264 = vmatprep.subr.mxu0 0.0
        %265 = vmatpush1.msra.mxu0 0.0
        %266 = vmatprep.subr.mxu0 0.0
        %267 = vmatpush1.msra.mxu0 0.0
        %268 = vmatprep.mubr.f32.mxu0 0.0
        %269 = vmatmul.mubr.f32.gmra.mrb[0].mxu0 %v198
        %v270 = vpop.f32.mrb[0].mxu0
        %v271 = vadd.f32 0.0, %v270
        %v272 = vpop.f32.mrb[0].mxu0
        %273 = vdwg.mxu0
        %274 = vrot.lane.b32.xlu0 %v192, 127
        %v275 = vpop.permute.xlu0 %274
        %v277 = vsel %vm196, %v193, 0
        %v279 = vsel %vm200, %v275, 0
        %281 = vmatprep.subr.mxu0 0.0
        %282 = vmatpush1.msra.mxu0 %v279
        %283 = vmatprep.subr.mxu0 0.0
        %284 = vmatpush1.msra.mxu0 0.0
        %285 = vmatprep.subr.mxu0 0.0
        %286 = vmatpush1.msra.mxu0 0.0
        %287 = vmatprep.subr.mxu0 0.0
        %288 = vmatpush1.msra.mxu0 0.0
        %289 = vmatprep.subr.mxu0 0.0
        %290 = vmatpush1.msra.mxu0 0.0
        %291 = vmatprep.subr.mxu0 0.0
        %292 = vmatpush1.msra.mxu0 0.0
        %293 = vmatprep.subr.mxu0 0.0
        %294 = vmatpush1.msra.mxu0 0.0
        %295 = vmatprep.subr.mxu0 0.0
        %296 = vmatpush1.msra.mxu0 0.0
        %297 = vmatprep.subr.mxu0 0.0
        %298 = vmatpush1.msra.mxu0 0.0
        %299 = vmatprep.subr.mxu0 0.0
        %300 = vmatpush1.msra.mxu0 0.0
        %301 = vmatprep.subr.mxu0 0.0
        %302 = vmatpush1.msra.mxu0 0.0
        %303 = vmatprep.subr.mxu0 0.0
        %304 = vmatpush1.msra.mxu0 0.0
        %305 = vmatprep.subr.mxu0 0.0
        %306 = vmatpush1.msra.mxu0 0.0
        %307 = vmatprep.subr.mxu0 0.0
        %308 = vmatpush1.msra.mxu0 0.0
        %309 = vmatprep.subr.mxu0 0.0
        %310 = vmatpush1.msra.mxu0 0.0
        %311 = vmatprep.subr.mxu0 0.0
        %312 = vmatpush1.msra.mxu0 0.0
        %313 = vmatprep.subr.mxu0 0.0
        %314 = vmatpush1.msra.mxu0 0.0
        %315 = vmatprep.subr.mxu0 0.0
        %316 = vmatpush1.msra.mxu0 0.0
        %317 = vmatprep.subr.mxu0 0.0
        %318 = vmatpush1.msra.mxu0 0.0
        %319 = vmatprep.subr.mxu0 0.0
        %320 = vmatpush1.msra.mxu0 0.0
        %321 = vmatprep.subr.mxu0 0.0
        %322 = vmatpush1.msra.mxu0 0.0
        %323 = vmatprep.subr.mxu0 0.0
        %324 = vmatpush1.msra.mxu0 0.0
        %325 = vmatprep.subr.mxu0 0.0
        %326 = vmatpush1.msra.mxu0 0.0
        %327 = vmatprep.subr.mxu0 0.0
        %328 = vmatpush1.msra.mxu0 0.0
        %329 = vmatprep.subr.mxu0 0.0
        %330 = vmatpush1.msra.mxu0 0.0
        %331 = vmatprep.subr.mxu0 0.0
        %332 = vmatpush1.msra.mxu0 0.0
        %333 = vmatprep.subr.mxu0 0.0
        %334 = vmatpush1.msra.mxu0 0.0
        %335 = vmatprep.subr.mxu0 0.0
        %336 = vmatpush1.msra.mxu0 0.0
        %337 = vmatprep.subr.mxu0 0.0
        %338 = vmatpush1.msra.mxu0 0.0
        %339 = vmatprep.subr.mxu0 0.0
        %340 = vmatpush1.msra.mxu0 0.0
        %341 = vmatprep.subr.mxu0 0.0
        %342 = vmatpush1.msra.mxu0 0.0
        %343 = vmatprep.subr.mxu0 0.0
        %344 = vmatpush1.msra.mxu0 0.0
        %345 = vmatprep.mubr.f32.mxu0 0.0
        %346 = vmatmul.mubr.f32.gmra.mrb[0].mxu0 %v277
        %v347 = vpop.f32.mrb[0].mxu0
        %v348 = vadd.f32 %v271, %v347
        %v349 = vpop.f32.mrb[0].mxu0
        %350 = vdwg.mxu0
        %352 = vset.pattern.permute.xlu0 0
        %353 = vperm.xlu0 %352, %v191
        %v354 = vpop.permute.xlu0 %353
        %v356 = vadd.f32 %v348, %v354
        %v357 = vmax.f32 %v356, 0.0
        %vm358 = vcmask 310272
        %359 = vst.msk [vmem:[%s183] sm:$0xff] %vm358, %v357
        %v360 = vld [vmem:[%s190] sm:$0xf]
        %s361 = scalar_lea.vmem %s1, 16
        %v362 = vld [vmem:[%s361] sm:$0xff]
        %s363 = scalar_lea.vmem %s1, 24
        %v364 = vld [vmem:[%s363] sm:$0xff]
        %366 = vrot.lane.b32.xlu0 %v360, 127
        %v367 = vpop.permute.xlu0 %366
        %v369 = vsel %vm196, %v364, 0
        %v371 = vsel %vm200, %v367, 0
        %373 = vmatprep.subr.mxu0 0.0
        %374 = vmatpush1.msra.mxu0 %v371
        %375 = vmatprep.subr.mxu0 0.0
        %376 = vmatpush1.msra.mxu0 0.0
        %377 = vmatprep.subr.mxu0 0.0
        %378 = vmatpush1.msra.mxu0 0.0
        %379 = vmatprep.subr.mxu0 0.0
        %380 = vmatpush1.msra.mxu0 0.0
        %381 = vmatprep.subr.mxu0 0.0
        %382 = vmatpush1.msra.mxu0 0.0
        %383 = vmatprep.subr.mxu0 0.0
        %384 = vmatpush1.msra.mxu0 0.0
        %385 = vmatprep.subr.mxu0 0.0
        %386 = vmatpush1.msra.mxu0 0.0
        %387 = vmatprep.subr.mxu0 0.0
        %388 = vmatpush1.msra.mxu0 0.0
        %389 = vmatprep.subr.mxu0 0.0
        %390 = vmatpush1.msra.mxu0 0.0
        %391 = vmatprep.subr.mxu0 0.0
        %392 = vmatpush1.msra.mxu0 0.0
        %393 = vmatprep.subr.mxu0 0.0
        %394 = vmatpush1.msra.mxu0 0.0
        %395 = vmatprep.subr.mxu0 0.0
        %396 = vmatpush1.msra.mxu0 0.0
        %397 = vmatprep.subr.mxu0 0.0
        %398 = vmatpush1.msra.mxu0 0.0
        %399 = vmatprep.subr.mxu0 0.0
        %400 = vmatpush1.msra.mxu0 0.0
        %401 = vmatprep.subr.mxu0 0.0
        %402 = vmatpush1.msra.mxu0 0.0
        %403 = vmatprep.subr.mxu0 0.0
        %404 = vmatpush1.msra.mxu0 0.0
        %405 = vmatprep.subr.mxu0 0.0
        %406 = vmatpush1.msra.mxu0 0.0
        %407 = vmatprep.subr.mxu0 0.0
        %408 = vmatpush1.msra.mxu0 0.0
        %409 = vmatprep.subr.mxu0 0.0
        %410 = vmatpush1.msra.mxu0 0.0
        %411 = vmatprep.subr.mxu0 0.0
        %412 = vmatpush1.msra.mxu0 0.0
        %413 = vmatprep.subr.mxu0 0.0
        %414 = vmatpush1.msra.mxu0 0.0
        %415 = vmatprep.subr.mxu0 0.0
        %416 = vmatpush1.msra.mxu0 0.0
        %417 = vmatprep.subr.mxu0 0.0
        %418 = vmatpush1.msra.mxu0 0.0
        %419 = vmatprep.subr.mxu0 0.0
        %420 = vmatpush1.msra.mxu0 0.0
        %421 = vmatprep.subr.mxu0 0.0
        %422 = vmatpush1.msra.mxu0 0.0
        %423 = vmatprep.subr.mxu0 0.0
        %424 = vmatpush1.msra.mxu0 0.0
        %425 = vmatprep.subr.mxu0 0.0
        %426 = vmatpush1.msra.mxu0 0.0
        %427 = vmatprep.subr.mxu0 0.0
        %428 = vmatpush1.msra.mxu0 0.0
        %429 = vmatprep.subr.mxu0 0.0
        %430 = vmatpush1.msra.mxu0 0.0
        %431 = vmatprep.subr.mxu0 0.0
        %432 = vmatpush1.msra.mxu0 0.0
        %433 = vmatprep.subr.mxu0 0.0
        %434 = vmatpush1.msra.mxu0 0.0
        %435 = vmatprep.subr.mxu0 0.0
        %436 = vmatpush1.msra.mxu0 0.0
        %437 = vmatprep.mubr.f32.mxu0 0.0
        %438 = vmatmul.mubr.f32.gmra.mrb[0].mxu0 %v369
        %v439 = vpop.f32.mrb[0].mxu0
        %v440 = vadd.f32 0.0, %v439
        %v441 = vpop.f32.mrb[0].mxu0
        %442 = vdwg.mxu0
        %443 = vrot.lane.b32.xlu0 %v360, 126
        %v444 = vpop.permute.xlu0 %443
        %v446 = vsel %vm196, %v362, 0
        %v448 = vsel %vm200, %v444, 0
        %450 = vmatprep.subr.mxu0 0.0
        %451 = vmatpush1.msra.mxu0 %v448
        %452 = vmatprep.subr.mxu0 0.0
        %453 = vmatpush1.msra.mxu0 0.0
        %454 = vmatprep.subr.mxu0 0.0
        %455 = vmatpush1.msra.mxu0 0.0
        %456 = vmatprep.subr.mxu0 0.0
        %457 = vmatpush1.msra.mxu0 0.0
        %458 = vmatprep.subr.mxu0 0.0
        %459 = vmatpush1.msra.mxu0 0.0
        %460 = vmatprep.subr.mxu0 0.0
        %461 = vmatpush1.msra.mxu0 0.0
        %462 = vmatprep.subr.mxu0 0.0
        %463 = vmatpush1.msra.mxu0 0.0
        %464 = vmatprep.subr.mxu0 0.0
        %465 = vmatpush1.msra.mxu0 0.0
        %466 = vmatprep.subr.mxu0 0.0
        %467 = vmatpush1.msra.mxu0 0.0
        %468 = vmatprep.subr.mxu0 0.0
        %469 = vmatpush1.msra.mxu0 0.0
        %470 = vmatprep.subr.mxu0 0.0
        %471 = vmatpush1.msra.mxu0 0.0
        %472 = vmatprep.subr.mxu0 0.0
        %473 = vmatpush1.msra.mxu0 0.0
        %474 = vmatprep.subr.mxu0 0.0
        %475 = vmatpush1.msra.mxu0 0.0
        %476 = vmatprep.subr.mxu0 0.0
        %477 = vmatpush1.msra.mxu0 0.0
        %478 = vmatprep.subr.mxu0 0.0
        %479 = vmatpush1.msra.mxu0 0.0
        %480 = vmatprep.subr.mxu0 0.0
        %481 = vmatpush1.msra.mxu0 0.0
        %482 = vmatprep.subr.mxu0 0.0
        %483 = vmatpush1.msra.mxu0 0.0
        %484 = vmatprep.subr.mxu0 0.0
        %485 = vmatpush1.msra.mxu0 0.0
        %486 = vmatprep.subr.mxu0 0.0
        %487 = vmatpush1.msra.mxu0 0.0
        %488 = vmatprep.subr.mxu0 0.0
        %489 = vmatpush1.msra.mxu0 0.0
        %490 = vmatprep.subr.mxu0 0.0
        %491 = vmatpush1.msra.mxu0 0.0
        %492 = vmatprep.subr.mxu0 0.0
        %493 = vmatpush1.msra.mxu0 0.0
        %494 = vmatprep.subr.mxu0 0.0
        %495 = vmatpush1.msra.mxu0 0.0
        %496 = vmatprep.subr.mxu0 0.0
        %497 = vmatpush1.msra.mxu0 0.0
        %498 = vmatprep.subr.mxu0 0.0
        %499 = vmatpush1.msra.mxu0 0.0
        %500 = vmatprep.subr.mxu0 0.0
        %501 = vmatpush1.msra.mxu0 0.0
        %502 = vmatprep.subr.mxu0 0.0
        %503 = vmatpush1.msra.mxu0 0.0
        %504 = vmatprep.subr.mxu0 0.0
        %505 = vmatpush1.msra.mxu0 0.0
        %506 = vmatprep.subr.mxu0 0.0
        %507 = vmatpush1.msra.mxu0 0.0
        %508 = vmatprep.subr.mxu0 0.0
        %509 = vmatpush1.msra.mxu0 0.0
        %510 = vmatprep.subr.mxu0 0.0
        %511 = vmatpush1.msra.mxu0 0.0
        %512 = vmatprep.subr.mxu0 0.0
        %513 = vmatpush1.msra.mxu0 0.0
        %514 = vmatprep.mubr.f32.mxu0 0.0
        %515 = vmatmul.mubr.f32.gmra.mrb[0].mxu0 %v446
        %v516 = vpop.f32.mrb[0].mxu0
        %v517 = vadd.f32 %v440, %v516
        %v518 = vpop.f32.mrb[0].mxu0
        %519 = vdwg.mxu0
        %v520 = vadd.f32 %v517, %v354
        %v521 = vmax.f32 %v520, 0.0
        %s522 = scalar_lea.vmem %s183, 8 [#allocation2]
        %523 = vst.msk [vmem:[%s522] sm:$0xff] %vm358, %v521
        %s524 = sand.u32 %s109, 1
        %s525 = scalar_lea.sflag [#allocation3], %s524
        %s526 = sand.u32 %s109, 1
        %s527 = smul.addr %s526, 16
        %s528 = scalar_lea.vmem [#allocation2], %s527
        // Predicated region
        $region33: #{tpu_custom_call.1} parent=31 // pred_check
          %p529 = pneg %p119
        $region34: #{tpu_custom_call.1} parent=31 // pred_check_branch
          %531 = sbr.rel (%p529) target = $region36
        $region35: #{tpu_custom_call.1} parent=31 // pred_region
          %s533 = ssub.s32 256, 256
          %534 = vsyncadd %s525, %s533
          %s535 = smul.addr %s21, 2
          %s536 = sadd.s32 %s22, %s535
          %s537 = smul.addr %s536, 128
          %s538 = scalar_lea.hbm %s3, %s537
          %s539 = sshll.u32 %s528, 4
          %s540 = int_to_ptr.vmem [resolvable:$true] %s539
          %545 = dma.vmem_to_hbm [thread:$0]  %s540, 256, %s538, %s525, 128, 128, 8
        $region36: #{tpu_custom_call.1} parent=31 // pred_fallthru
          _
      $region32: #{tpu_custom_call.1} parent=5 // pred_fallthru
        _
      %p546 = scmp.le.s32.totalorder 2, %s12
      // Predicated region
      $region37: #{tpu_custom_call.1} parent=5 // pred_check
        %p547 = pneg %p546
      $region38: #{tpu_custom_call.1} parent=5 // pred_check_branch
        %549 = sbr.rel (%p547) target = $region40
      $region39: #{tpu_custom_call.1} parent=5 // pred_region
        %s550 = ssub.s32 %s12, 2
        // Predicated region
        $region41: #{tpu_custom_call.1} parent=39 // pred_check
          %p551 = pneg %p125
        $region42: #{tpu_custom_call.1} parent=39 // pred_check_branch
          %553 = sbr.rel (%p551) target = $region44
        $region43: #{tpu_custom_call.1} parent=39 // pred_region
          %s554 = sand.u32 %s110, 1
          %s555 = scalar_lea.sflag [#allocation3], %s554
          %s556 = sand.u32 %s110, 1
          %s557 = smul.addr %s556, 16
          %s558 = scalar_lea.vmem [#allocation2], %s557
          %559 = dma.done %s555, 256
        $region44: #{tpu_custom_call.1} parent=39 // pred_fallthru
          _
      $region40: #{tpu_custom_call.1} parent=5 // pred_fallthru
        _
    $region6: #{tpu_custom_call.1} parent=1 // loop_footer
      %s16 = sadd.s32 1, %s12
    $region7: #{tpu_custom_call.1} parent=1 // loop_footer_branch
      %11 = sbr.rel target = $region3
    $region8: #{tpu_custom_call.1} parent=1 // loop_exit
      _
    %560 = vsyncpa [#allocation3], 1
    %s561 = scalar_lea.sflag [#allocation3], 1
    %562 = vsyncpa %s561, 1

</llo_original>
